<compile_context>
chip_gen: v7x
topology: tpu7x:2x2x1
jax: 0.10.0
libtpu: 0.0.40
codegen_flags: <defaults>
</compile_context>

<pallas_src>
import jax
import jax.numpy as jnp
from jax.experimental import pallas as pl
from jax.experimental.pallas import tpu as pltpu

NEG_SLOPE = 0.1  # actV3 = nn.LeakyReLU(0.1)


# ---------------------------------------------------------------------------
# Fused kernel:
#   x (MB, C) --W0/b0/LeakyReLU--> p32 (MB, 256)   [stored]
#   p32 --W1/b1/LeakyReLU--> q (MB, 128)
#   q + x16 block --> p16 block with H/W 2x duplication and channel concat.
#
# Refs:
#   x_ref   : (MB, C)                bf16   MB = th * W32 rows of x32
#   w0_ref  : (C, 256)   b0_ref: (1, 256)
#   w1_ref  : (256, 128) b1_ref: (1, 128)
#   x16_ref : (1, th, 2, W32, 2*C16) f32    ("W-paired" x16 view)
#   p32_ref : (MB, 256)              f32
#   p16_ref : (1, th, 2, W32, 2*(128+C16)) f32
# ---------------------------------------------------------------------------
def _head_fused_kernel(x_ref, w0_ref, b0_ref, w1_ref, b1_ref, x16_ref,
                       p32_ref, p16_ref):
    x = x_ref[...]                                                 # (MB, C) bf16
    h = jnp.dot(x, w0_ref[...],
                preferred_element_type=jnp.float32) + b0_ref[...]
    p32 = jnp.maximum(h, NEG_SLOPE * h)                            # LeakyReLU(0.1)
    p32_ref[...] = p32                                             # (MB, 256) f32

    g = jnp.dot(p32.astype(jnp.bfloat16), w1_ref[...],
                preferred_element_type=jnp.float32) + b1_ref[...]
    q = jnp.maximum(g, NEG_SLOPE * g)                              # (MB, 128) f32

    th = x16_ref.shape[1]
    w32 = x16_ref.shape[3]
    c16 = x16_ref.shape[4] // 2
    c1 = q.shape[-1]                                               # 128
    cc = c1 + c16                                                  # per-pixel p16 channels

    # (MB, 128) -> (th, W32, 128): layout no-op when W32 % 8 == 0.
    # TODO(synk): for odd real-model widths (e.g. 13) pad W32 to a multiple of 8
    #             in the wrapper; test shapes below keep W32 % 8 == 0.
    q3 = q.reshape(th, w32, c1)

    # H duplication: one lane-dense store per duplicated row (no broadcast copy).
    # W duplication: q goes into both W-paired channel slabs (offsets 0 and cc).
    for dh in range(2):
        p16_ref[0, :, dh, :, 0:c1] = q3
        p16_ref[0, :, dh, :, cc:cc + c1] = q3

    # Channel concat: x16 pass-through into its two W-paired slabs (lane-aligned).
    p16_ref[0, :, :, :, c1:c1 + c16] = x16_ref[0, :, :, :, 0:c16]
    p16_ref[0, :, :, :, cc + c1:cc + c1 + c16] = x16_ref[0, :, :, :, c16:2 * c16]


def _pick_th(N, H32, W32, max_rows=256):
    """Largest divisor of H32 with th*W32 <= max_rows rows per block,
    shrunk if needed so the grid has >= 2 steps (v7x has 2 TensorCores)."""
    divs = [d for d in range(1, H32 + 1) if H32 % d == 0]
    cands = [d for d in divs if d * W32 <= max_rows] or [1]
    th = max(cands)
    if N * (H32 // th) < 2:
        smaller = [d for d in cands if d < th]
        if smaller:
            th = max(smaller)
    return th


def head_fused(x32f, x16p, w0, b0, w1, b1, N, H32, W32, th):
    """x32f: (N*H32*W32, C) bf16;  x16p: (N, H32, 2, W32, 2*C16) f32.
    Returns p32 flat (M, 256) f32 and the W-paired p16 (N, H32, 2, W32, 2*(128+C16)) f32."""
    M, C = x32f.shape
    C0 = w0.shape[1]
    C1 = w1.shape[1]
    C16 = x16p.shape[-1] // 2
    CC = C1 + C16
    HB = H32 // th
    MB = th * W32
    grid = (N, HB)

    p32, p16p = pl.pallas_call(
        _head_fused_kernel,
        out_shape=(jax.ShapeDtypeStruct((M, C0), jnp.float32),
                   jax.ShapeDtypeStruct((N, H32, 2, W32, 2 * CC), jnp.float32)),
        grid=grid,
        in_specs=[
            pl.BlockSpec((MB, C), lambda n, h: (n * HB + h, 0)),        # x32 rows
            pl.BlockSpec((C, C0), lambda n, h: (0, 0)),                 # W0 (resident)
            pl.BlockSpec((1, C0), lambda n, h: (0, 0)),                 # folded BN bias 0
            pl.BlockSpec((C0, C1), lambda n, h: (0, 0)),                # W1 (resident)
            pl.BlockSpec((1, C1), lambda n, h: (0, 0)),                 # folded BN bias 1
            pl.BlockSpec((1, th, 2, W32, 2 * C16),
                         lambda n, h: (n, h, 0, 0, 0)),                 # x16 (paired)
        ],
        out_specs=(pl.BlockSpec((MB, C0), lambda n, h: (n * HB + h, 0)),
                   pl.BlockSpec((1, th, 2, W32, 2 * CC),
                                lambda n, h: (n, h, 0, 0, 0))),
        compiler_params=pltpu.CompilerParams(
            dimension_semantics=("parallel", "parallel")),
    )(x32f, w0, b0, w1, b1, x16p)
    return p32, p16p


# ---------------------------------------------------------------------------
# Deterministic parameters.  Conv(bias=False) + BatchNorm2d(eval) folded:
# running_mean=0, running_var=1, eps=1e-5 -> scale=gamma/sqrt(1+eps), shift=beta.
# Weights stored in bf16 (MXU operands); biases kept in f32.
# ---------------------------------------------------------------------------
def make_conv1x1(key, cin, cout):
    kw, kg, kb = jax.random.split(key, 3)
    W = jax.random.normal(kw, (cin, cout), jnp.float32) / jnp.sqrt(cin)
    gamma = 1.0 + 0.1 * jax.random.normal(kg, (cout,), jnp.float32)
    beta = 0.05 * jax.random.normal(kb, (cout,), jnp.float32)
    scale = gamma / jnp.sqrt(1.0 + 1e-5)
    Wf = (W * scale[None, :]).astype(jnp.bfloat16)
    return Wf, beta.reshape(1, cout)


def build_head(key, c):
    k0, k1 = jax.random.split(key)
    w0, b0 = make_conv1x1(k0, c, 256)    # b0 = Conv(c, 256, 1, act=LeakyReLU)
    w1, b1 = make_conv1x1(k1, 256, 128)  # b1 = Conv(256, 128, 1, act=LeakyReLU)
    return {"w0": w0, "b0": b0, "w1": w1, "b1": b1}


# ---------------------------------------------------------------------------
# Forward pass (matches HeadV3Tiny.forward -> (p16, p32), NCHW in/out)
# ---------------------------------------------------------------------------
def head_v3_tiny_forward(params, x16_nchw, x32_nchw, th=None):
    x32 = jnp.transpose(x32_nchw, (0, 2, 3, 1))        # NCHW -> NHWC
    x16 = jnp.transpose(x16_nchw, (0, 2, 3, 1))
    N, H32, W32, C = x32.shape
    _, H16, W16, C16 = x16.shape

    # Free (metadata-only) reshapes of dense row-major arrays.
    x32f = x32.reshape(N * H32 * W32, C).astype(jnp.bfloat16)   # bf16 MXU operands
    x16p = x16.reshape(N, H32, 2, W32, 2 * C16)                 # W-paired view

    if th is None:
        th = _pick_th(N, H32, W32)

    p32f, p16p = head_fused(x32f, x16p, params["w0"], params["b0"],
                            params["w1"], params["b1"], N, H32, W32, th)

    p32 = p32f.reshape(N, H32, W32, 256)
    # Free merge of the split-H axis and the W-paired channel axis:
    # (N, H32, 2, W32, 2*(128+C16)) -> (N, H16, W16, 128+C16)
    p16 = p16p.reshape(N, H16, W16, 128 + C16)

    to_nchw = lambda t: jnp.transpose(t, (0, 3, 1, 2))
    return to_nchw(p16), to_nchw(p32)


# ---------------------------------------------------------------------------
# Plain-JAX reference (same folded bf16 weights, f32 math) for validation.
# ---------------------------------------------------------------------------
def reference_forward(params, x16_nchw, x32_nchw):
    w0 = params["w0"].astype(jnp.float32)
    w1 = params["w1"].astype(jnp.float32)
    b0 = params["b0"][0]
    b1 = params["b1"][0]
    x32 = jnp.transpose(x32_nchw, (0, 2, 3, 1))
    x16 = jnp.transpose(x16_nchw, (0, 2, 3, 1))
    h = jnp.einsum("nhwc,cd->nhwd", x32, w0) + b0
    p32 = jnp.where(h > 0, h, NEG_SLOPE * h)
    g = jnp.einsum("nhwc,cd->nhwd", p32, w1) + b1
    q = jnp.where(g > 0, g, NEG_SLOPE * g)
    up = jnp.repeat(jnp.repeat(q, 2, axis=1), 2, axis=2)
    p16 = jnp.concatenate([up, x16], axis=-1)
    to_nchw = lambda t: jnp.transpose(t, (0, 3, 1, 2))
    return to_nchw(p16), to_nchw(p32)


if __name__ == "__main__":
    key = jax.random.PRNGKey(0)
    pkey, k16, k32 = jax.random.split(key, 3)

    # Small but architecture-consistent shapes: x16 spatial = 2 * x32 spatial,
    # W32 a multiple of 8 (keeps the single in-kernel reshape a layout no-op).
    c, c16 = 256, 256
    N, H32, W32 = 2, 8, 8
    H16, W16 = 2 * H32, 2 * W32

    params = build_head(pkey, c)
    x32 = jax.random.normal(k32, (N, c, H32, W32), jnp.float32)
    x16 = jax.random.normal(k16, (N, c16, H16, W16), jnp.float32)

    fwd = jax.jit(head_v3_tiny_forward)
    p16, p32 = fwd(params, x16, x32)
    jax.block_until_ready((p16, p32))

    assert p32.shape == (N, 256, H32, W32), p32.shape
    assert p16.shape == (N, 128 + c16, H16, W16), p16.shape
    assert jnp.all(jnp.isfinite(p16)) and jnp.all(jnp.isfinite(p32))

    # Correctness vs f32 reference (bf16 MXU operands -> loose tolerance).
    r16, r32 = reference_forward(params, x16, x32)
    assert jnp.max(jnp.abs(p32 - r32)) < 0.1, float(jnp.max(jnp.abs(p32 - r32)))
    assert jnp.max(jnp.abs(p16 - r16)) < 0.1, float(jnp.max(jnp.abs(p16 - r16)))

    print("KERNEL_OK")
</pallas_src>

<mosaic_0001>
module attributes {stable_mosaic.version = 11 : i64} {
  func.func @_head_fused_kernel(%arg0: i32, %arg1: i32, %arg2: memref<64x256xbf16, #tpu.memory_space<vmem>>, %arg3: memref<256x256xbf16, #tpu.memory_space<vmem>>, %arg4: memref<1x256xf32, #tpu.memory_space<vmem>>, %arg5: memref<256x128xbf16, #tpu.memory_space<vmem>>, %arg6: memref<1x128xf32, #tpu.memory_space<vmem>>, %arg7: memref<1x8x2x8x512xf32, #tpu.memory_space<vmem>>, %arg8: memref<64x256xf32, #tpu.memory_space<vmem>>, %arg9: memref<1x8x2x8x768xf32, #tpu.memory_space<vmem>>) attributes {dimension_semantics = [#tpu.dimension_semantics<parallel>, #tpu.dimension_semantics<parallel>], iteration_bounds = array<i64: 2, 1>, scalar_prefetch = 0 : i64, scratch_operands = 0 : i64, tpu.core_type = #tpu.core_type<tc>, window_params = [{transform_indices = @transform_0, window_bounds = array<i64: 64, 256>}, {pipeline_mode = #tpu.pipeline_mode<synchronous>, transform_indices = @transform_1, window_bounds = array<i64: 256, 256>}, {pipeline_mode = #tpu.pipeline_mode<synchronous>, transform_indices = @transform_2, window_bounds = array<i64: 1, 256>}, {pipeline_mode = #tpu.pipeline_mode<synchronous>, transform_indices = @transform_3, window_bounds = array<i64: 256, 128>}, {pipeline_mode = #tpu.pipeline_mode<synchronous>, transform_indices = @transform_4, window_bounds = array<i64: 1, 128>}, {transform_indices = @transform_5, window_bounds = array<i64: 1, 8, 2, 8, 512>}, {transform_indices = @transform_6, window_bounds = array<i64: 64, 256>}, {transform_indices = @transform_7, window_bounds = array<i64: 1, 8, 2, 8, 768>}]} {
    %c0 = arith.constant 0 : index
    %c0_0 = arith.constant 0 : index
    %0 = vector.load %arg2[%c0, %c0_0] : memref<64x256xbf16, #tpu.memory_space<vmem>>, vector<64x256xbf16>
    %c0_1 = arith.constant 0 : index
    %c0_2 = arith.constant 0 : index
    %1 = vector.load %arg3[%c0_1, %c0_2] : memref<256x256xbf16, #tpu.memory_space<vmem>>, vector<256x256xbf16>
    %cst = arith.constant dense<0.000000e+00> : vector<64x256xf32>
    %2 = tpu.matmul %0, %1, %cst {dimension_numbers = #tpu.dot_dimension_numbers<[1], [0], [0], [1], [0, 0, 1, 1], [], []>} : vector<64x256xbf16>, vector<256x256xbf16>, vector<64x256xf32> -> vector<64x256xf32>
    %c0_3 = arith.constant 0 : index
    %c0_4 = arith.constant 0 : index
    %3 = vector.load %arg4[%c0_3, %c0_4] : memref<1x256xf32, #tpu.memory_space<vmem>>, vector<1x256xf32>
    %4 = vector.broadcast %3 : vector<1x256xf32> to vector<64x256xf32>
    %5 = arith.addf %2, %4 : vector<64x256xf32>
    %cst_5 = arith.constant 1.000000e-01 : f32
    %6 = vector.broadcast %cst_5 : f32 to vector<64x256xf32>
    %7 = arith.mulf %6, %5 : vector<64x256xf32>
    %8 = arith.maximumf %5, %7 : vector<64x256xf32>
    %c0_6 = arith.constant 0 : index
    %c0_7 = arith.constant 0 : index
    %9 = vector.load %arg8[%c0_6, %c0_7] : memref<64x256xf32, #tpu.memory_space<vmem>>, vector<64x256xf32>
    tpu.vector_store %arg8[%c0_6, %c0_7], %8 {strides = array<i32>} : memref<64x256xf32, #tpu.memory_space<vmem>>, vector<64x256xf32>,
    %10 = arith.truncf %8 : vector<64x256xf32> to vector<64x256xbf16>
    %c0_8 = arith.constant 0 : index
    %c0_9 = arith.constant 0 : index
    %11 = vector.load %arg5[%c0_8, %c0_9] : memref<256x128xbf16, #tpu.memory_space<vmem>>, vector<256x128xbf16>
    %cst_10 = arith.constant dense<0.000000e+00> : vector<64x128xf32>
    %12 = tpu.matmul %10, %11, %cst_10 {dimension_numbers = #tpu.dot_dimension_numbers<[1], [0], [0], [1], [0, 0, 1, 1], [], []>} : vector<64x256xbf16>, vector<256x128xbf16>, vector<64x128xf32> -> vector<64x128xf32>
    %c0_11 = arith.constant 0 : index
    %c0_12 = arith.constant 0 : index
    %13 = vector.load %arg6[%c0_11, %c0_12] : memref<1x128xf32, #tpu.memory_space<vmem>>, vector<1x128xf32>
    %14 = vector.broadcast %13 : vector<1x128xf32> to vector<64x128xf32>
    %15 = arith.addf %12, %14 : vector<64x128xf32>
    %cst_13 = arith.constant 1.000000e-01 : f32
    %16 = vector.broadcast %cst_13 : f32 to vector<64x128xf32>
    %17 = arith.mulf %16, %15 : vector<64x128xf32>
    %18 = arith.maximumf %15, %17 : vector<64x128xf32>
    %19 = vector.shape_cast %18 : vector<64x128xf32> to vector<8x8x128xf32>
    %c0_14 = arith.constant 0 : index
    %c0_15 = arith.constant 0 : index
    %c0_16 = arith.constant 0 : index
    %c0_17 = arith.constant 0 : index
    %c0_18 = arith.constant 0 : index
    %20 = vector.load %arg9[%c0_14, %c0_15, %c0_16, %c0_17, %c0_18] : memref<1x8x2x8x768xf32, #tpu.memory_space<vmem>>, vector<1x8x1x8x128xf32>
    %21 = vector.shape_cast %20 : vector<1x8x1x8x128xf32> to vector<8x8x128xf32>
    %22 = vector.shape_cast %19 : vector<8x8x128xf32> to vector<1x8x1x8x128xf32>
    tpu.vector_store %arg9[%c0_14, %c0_15, %c0_16, %c0_17, %c0_18], %22 {strides = array<i32>} : memref<1x8x2x8x768xf32, #tpu.memory_space<vmem>>, vector<1x8x1x8x128xf32>,
    %c0_19 = arith.constant 0 : index
    %c0_20 = arith.constant 0 : index
    %c0_21 = arith.constant 0 : index
    %c0_22 = arith.constant 0 : index
    %c384 = arith.constant 384 : index
    %23 = vector.load %arg9[%c0_19, %c0_20, %c0_21, %c0_22, %c384] : memref<1x8x2x8x768xf32, #tpu.memory_space<vmem>>, vector<1x8x1x8x128xf32>
    %24 = vector.shape_cast %23 : vector<1x8x1x8x128xf32> to vector<8x8x128xf32>
    %25 = vector.shape_cast %19 : vector<8x8x128xf32> to vector<1x8x1x8x128xf32>
    tpu.vector_store %arg9[%c0_19, %c0_20, %c0_21, %c0_22, %c384], %25 {strides = array<i32>} : memref<1x8x2x8x768xf32, #tpu.memory_space<vmem>>, vector<1x8x1x8x128xf32>,
    %c0_23 = arith.constant 0 : index
    %c0_24 = arith.constant 0 : index
    %c1 = arith.constant 1 : index
    %c0_25 = arith.constant 0 : index
    %c0_26 = arith.constant 0 : index
    %26 = vector.load %arg9[%c0_23, %c0_24, %c1, %c0_25, %c0_26] : memref<1x8x2x8x768xf32, #tpu.memory_space<vmem>>, vector<1x8x1x8x128xf32>
    %27 = vector.shape_cast %26 : vector<1x8x1x8x128xf32> to vector<8x8x128xf32>
    %28 = vector.shape_cast %19 : vector<8x8x128xf32> to vector<1x8x1x8x128xf32>
    tpu.vector_store %arg9[%c0_23, %c0_24, %c1, %c0_25, %c0_26], %28 {strides = array<i32>} : memref<1x8x2x8x768xf32, #tpu.memory_space<vmem>>, vector<1x8x1x8x128xf32>,
    %c0_27 = arith.constant 0 : index
    %c0_28 = arith.constant 0 : index
    %c1_29 = arith.constant 1 : index
    %c0_30 = arith.constant 0 : index
    %c384_31 = arith.constant 384 : index
    %29 = vector.load %arg9[%c0_27, %c0_28, %c1_29, %c0_30, %c384_31] : memref<1x8x2x8x768xf32, #tpu.memory_space<vmem>>, vector<1x8x1x8x128xf32>
    %30 = vector.shape_cast %29 : vector<1x8x1x8x128xf32> to vector<8x8x128xf32>
    %31 = vector.shape_cast %19 : vector<8x8x128xf32> to vector<1x8x1x8x128xf32>
    tpu.vector_store %arg9[%c0_27, %c0_28, %c1_29, %c0_30, %c384_31], %31 {strides = array<i32>} : memref<1x8x2x8x768xf32, #tpu.memory_space<vmem>>, vector<1x8x1x8x128xf32>,
    %c0_32 = arith.constant 0 : index
    %c0_33 = arith.constant 0 : index
    %c0_34 = arith.constant 0 : index
    %c0_35 = arith.constant 0 : index
    %c0_36 = arith.constant 0 : index
    %32 = vector.load %arg7[%c0_32, %c0_33, %c0_34, %c0_35, %c0_36] : memref<1x8x2x8x512xf32, #tpu.memory_space<vmem>>, vector<1x8x2x8x256xf32>
    %33 = vector.shape_cast %32 : vector<1x8x2x8x256xf32> to vector<8x2x8x256xf32>
    %c0_37 = arith.constant 0 : index
    %c0_38 = arith.constant 0 : index
    %c0_39 = arith.constant 0 : index
    %c0_40 = arith.constant 0 : index
    %c128 = arith.constant 128 : index
    %34 = vector.load %arg9[%c0_37, %c0_38, %c0_39, %c0_40, %c128] : memref<1x8x2x8x768xf32, #tpu.memory_space<vmem>>, vector<1x8x2x8x256xf32>
    %35 = vector.shape_cast %34 : vector<1x8x2x8x256xf32> to vector<8x2x8x256xf32>
    %36 = vector.shape_cast %33 : vector<8x2x8x256xf32> to vector<1x8x2x8x256xf32>
    tpu.vector_store %arg9[%c0_37, %c0_38, %c0_39, %c0_40, %c128], %36 {strides = array<i32>} : memref<1x8x2x8x768xf32, #tpu.memory_space<vmem>>, vector<1x8x2x8x256xf32>,
    %c0_41 = arith.constant 0 : index
    %c0_42 = arith.constant 0 : index
    %c0_43 = arith.constant 0 : index
    %c0_44 = arith.constant 0 : index
    %c256 = arith.constant 256 : index
    %37 = vector.load %arg7[%c0_41, %c0_42, %c0_43, %c0_44, %c256] : memref<1x8x2x8x512xf32, #tpu.memory_space<vmem>>, vector<1x8x2x8x256xf32>
    %38 = vector.shape_cast %37 : vector<1x8x2x8x256xf32> to vector<8x2x8x256xf32>
    %c0_45 = arith.constant 0 : index
    %c0_46 = arith.constant 0 : index
    %c0_47 = arith.constant 0 : index
    %c0_48 = arith.constant 0 : index
    %c512 = arith.constant 512 : index
    %39 = vector.load %arg9[%c0_45, %c0_46, %c0_47, %c0_48, %c512] : memref<1x8x2x8x768xf32, #tpu.memory_space<vmem>>, vector<1x8x2x8x256xf32>
    %40 = vector.shape_cast %39 : vector<1x8x2x8x256xf32> to vector<8x2x8x256xf32>
    %41 = vector.shape_cast %38 : vector<8x2x8x256xf32> to vector<1x8x2x8x256xf32>
    tpu.vector_store %arg9[%c0_45, %c0_46, %c0_47, %c0_48, %c512], %41 {strides = array<i32>} : memref<1x8x2x8x768xf32, #tpu.memory_space<vmem>>, vector<1x8x2x8x256xf32>,
    return
  }
  func.func @transform_0(%arg0: i32, %arg1: i32) -> (i32, i32) {
    %c1_i32 = arith.constant 1 : i32
    %0 = arith.muli %arg0, %c1_i32 : i32
    %1 = arith.addi %0, %arg1 : i32
    %c0_i32 = arith.constant 0 : i32
    %c0_i32_0 = arith.constant 0 : i32
    return %1, %c0_i32 : i32, i32
  }
  func.func @transform_1(%arg0: i32, %arg1: i32) -> (i32, i32) {
    %c0_i32 = arith.constant 0 : i32
    %c0_i32_0 = arith.constant 0 : i32
    %c0_i32_1 = arith.constant 0 : i32
    return %c0_i32, %c0_i32_0 : i32, i32
  }
  func.func @transform_2(%arg0: i32, %arg1: i32) -> (i32, i32) {
    %c0_i32 = arith.constant 0 : i32
    %c0_i32_0 = arith.constant 0 : i32
    %c0_i32_1 = arith.constant 0 : i32
    return %c0_i32, %c0_i32_0 : i32, i32
  }
  func.func @transform_3(%arg0: i32, %arg1: i32) -> (i32, i32) {
    %c0_i32 = arith.constant 0 : i32
    %c0_i32_0 = arith.constant 0 : i32
    %c0_i32_1 = arith.constant 0 : i32
    return %c0_i32, %c0_i32_0 : i32, i32
  }
  func.func @transform_4(%arg0: i32, %arg1: i32) -> (i32, i32) {
    %c0_i32 = arith.constant 0 : i32
    %c0_i32_0 = arith.constant 0 : i32
    %c0_i32_1 = arith.constant 0 : i32
    return %c0_i32, %c0_i32_0 : i32, i32
  }
  func.func @transform_5(%arg0: i32, %arg1: i32) -> (i32, i32, i32, i32, i32) {
    %c0_i32 = arith.constant 0 : i32
    %c0_i32_0 = arith.constant 0 : i32
    %c0_i32_1 = arith.constant 0 : i32
    %c0_i32_2 = arith.constant 0 : i32
    return %arg0, %arg1, %c0_i32, %c0_i32_0, %c0_i32_1 : i32, i32, i32, i32, i32
  }
  func.func @transform_6(%arg0: i32, %arg1: i32) -> (i32, i32) {
    %c1_i32 = arith.constant 1 : i32
    %0 = arith.muli %arg0, %c1_i32 : i32
    %1 = arith.addi %0, %arg1 : i32
    %c0_i32 = arith.constant 0 : i32
    %c0_i32_0 = arith.constant 0 : i32
    return %1, %c0_i32 : i32, i32
  }
  func.func @transform_7(%arg0: i32, %arg1: i32) -> (i32, i32, i32, i32, i32) {
    %c0_i32 = arith.constant 0 : i32
    %c0_i32_0 = arith.constant 0 : i32
    %c0_i32_1 = arith.constant 0 : i32
    %c0_i32_2 = arith.constant 0 : i32
    return %arg0, %arg1, %c0_i32, %c0_i32_0, %c0_i32_1 : i32, i32, i32, i32, i32
  }
}

</mosaic_0001>

<llo_original>
// kernel: head_v3_tiny_forward.1
$region0: #{head_v3_tiny_forward.1}
  #allocation0 [shape = 'u32[]', space=smem, size = 0x4, offset = 0x4, fixed_abs, tag = 'smem constant byte address 0x4 - core index']
  #allocation1 [shape = 'u32[144,128]{1,0:T(1,128)}', space=vmem, size = 0x12000, scoped, tag = 'internal scratch']
  %s0 = inlined_call_operand.vmem [shape: bf16[128,256], index: 0, kind: input, shape index: {}]
  %s1 = inlined_call_operand.vmem [shape: bf16[256,256], index: 1, kind: input, shape index: {}]
  %s2 = inlined_call_operand.vmem [shape: f32[1,256], index: 2, kind: input, shape index: {}]
  %s3 = inlined_call_operand.vmem [shape: bf16[256,128], index: 3, kind: input, shape index: {}]
  %s4 = inlined_call_operand.vmem [shape: f32[1,128], index: 4, kind: input, shape index: {}]
  %s5 = inlined_call_operand.vmem [shape: f32[2,8,2,8,512], index: 5, kind: input, shape index: {}]
  %s6 = inlined_call_operand.hbm [shape: f32[128,256], index: 6, kind: output, shape index: {0}]
  %s7 = inlined_call_operand.vmem [shape: f32[2,8,2,8,768], index: 7, kind: output, shape index: {1}]
  %8 = xla_tuple %s6, %s7
  %s9 = sld [smem:[#allocation0]]
  $region65: #{head_v3_tiny_forward.1} parent=0
    _
  %s11 = ssub.s32 1, %s9
  %s12 = scalar_select 0, %s11, %s9
  $region1: #{head_v3_tiny_forward.1} parent=0
    #allocation2 [shape = 'u8[131072]{0}', space=vmem, size = 0x20000, scoped, tag = 'output window, operand 0']
    #allocation3 [shape = 's32[2]{0}', space=sflag, size = 0x8, scoped, tag = 'scoped memory for head_v3_tiny_forward.1']
    %13 = vsyncpa [#allocation3], 0
    %s14 = scalar_lea.sflag [#allocation3], 1
    %15 = vsyncpa %s14, 0
    loop: start=0, step=1, limit=4
    $region2: #{head_v3_tiny_forward.1} parent=1 // loop_pre_header
      _
    $region3: #{head_v3_tiny_forward.1} parent=1 // loop_header
      %s17 = sphi 0, %s21
      %p18 = scmp.ge.s32.totalorder %s17, 4
      %s24 = sphi 0, %s36
      %s25 = sphi 0, %s32
      %s26 = sphi 0, %s24
      %s27 = sphi 0, %s25
      %s28 = sphi 0, %s26
      %s29 = sphi 0, %s27
      %s41 = sphi 0, %s43
      %s44 = sphi 0, %s41
      %s45 = sphi 0, %s44
      %s61 = sphi 0, %s45
      %s65 = sphi 0, %s65
      %s67 = sphi 0, %s65
      %s68 = sphi 0, %s67
      %s82 = sphi 0, %s68
      %s86 = sphi 0, %s86
      %s88 = sphi 0, %s86
      %s89 = sphi 0, %s88
      %s103 = sphi 0, %s89
      %s107 = sphi 0, %s107
      %s109 = sphi 0, %s107
      %s110 = sphi 0, %s109
      %s124 = sphi 0, %s110
      %s128 = sphi 0, %s128
      %s130 = sphi 0, %s128
      %s131 = sphi 0, %s130
      %s145 = sphi 0, %s131
      %s153 = sphi 0, %s155
      %s156 = sphi 0, %s153
      %s157 = sphi 0, %s156
      %s173 = sphi 0, %s157
      %s181 = sphi 0, %s183
      %s184 = sphi 0, %s181
      %s185 = sphi 0, %s184
      %s201 = sphi 0, %s185
      %s209 = sphi 0, %s211
      %s212 = sphi 0, %s209
      %s213 = sphi 0, %s212
      %s229 = sphi 0, %s213
    $region4: #{head_v3_tiny_forward.1} parent=1 // loop_header_branch
      %20 = sbr.rel (%p18) target = $region8
    $region5: #{head_v3_tiny_forward.1} parent=1 // loop_body
      %s22 = ssub.s32 %s17, 1
      %s23 = ssub.s32 %s17, 2
      %s30 = sadd.s32 1, %s25
      %p31 = scmp.ge.s32.totalorder %s30, 1
      %s32 = scalar_select %p31, 0, %s30
      %s33 = sadd.s32 1, %s24
      %s34 = scalar_select %p31, %s33, %s24
      %p35 = scmp.ge.s32.totalorder %s34, 2
      %s36 = scalar_select %p35, 0, %s34
      %s37 = sadd.s32 %s24, %s25
      %s38 = sadd.s32 %s36, %s32
      %s39 = ssub.s32 %s37, %s38
      %p40 = scmp.eq.s32.totalorder %s39, 0
      %s42 = sadd.s32 %s41, 1
      %s43 = scalar_select %p40, %s41, %s42
      %p46 = pneg %p40
      %p47 = scmp.eq.s32.totalorder %s17, 1
      %p48 = por %p46, %p47
      %p49 = scmp.ne.s32.totalorder %s41, %s44
      %p50 = scmp.eq.s32.totalorder %s17, 0
      %p51 = por %p49, %p50
      %p52 = scmp.ne.s32.totalorder %s41, %s44
      %p53 = scmp.eq.s32.totalorder %s22, 1
      %p54 = por %p52, %p53
      %p55 = scmp.ne.s32.totalorder %s44, %s45
      %p56 = scmp.eq.s32.totalorder %s22, 0
      %p57 = por %p55, %p56
      %p58 = scmp.ne.s32.totalorder %s44, %s45
      %p59 = scmp.eq.s32.totalorder %s23, 1
      %p60 = por %p58, %p59
      %p62 = scmp.ne.s32.totalorder %s45, %s61
      %p63 = scmp.eq.s32.totalorder %s23, 0
      %p64 = por %p62, %p63
      %s66 = sadd.s32 %s65, 1
      %p69 = scmp.eq.s32.totalorder %s17, 1
      %p70 = scmp.ne.s32.totalorder %s65, %s67
      %p71 = scmp.eq.s32.totalorder %s17, 0
      %p72 = por %p70, %p71
      %p73 = scmp.ne.s32.totalorder %s65, %s67
      %p74 = scmp.eq.s32.totalorder %s22, 1
      %p75 = por %p73, %p74
      %p76 = scmp.ne.s32.totalorder %s67, %s68
      %p77 = scmp.eq.s32.totalorder %s22, 0
      %p78 = por %p76, %p77
      %p79 = scmp.ne.s32.totalorder %s67, %s68
      %p80 = scmp.eq.s32.totalorder %s23, 1
      %p81 = por %p79, %p80
      %p83 = scmp.ne.s32.totalorder %s68, %s82
      %p84 = scmp.eq.s32.totalorder %s23, 0
      %p85 = por %p83, %p84
      %s87 = sadd.s32 %s86, 1
      %p90 = scmp.eq.s32.totalorder %s17, 1
      %p91 = scmp.ne.s32.totalorder %s86, %s88
      %p92 = scmp.eq.s32.totalorder %s17, 0
      %p93 = por %p91, %p92
      %p94 = scmp.ne.s32.totalorder %s86, %s88
      %p95 = scmp.eq.s32.totalorder %s22, 1
      %p96 = por %p94, %p95
      %p97 = scmp.ne.s32.totalorder %s88, %s89
      %p98 = scmp.eq.s32.totalorder %s22, 0
      %p99 = por %p97, %p98
      %p100 = scmp.ne.s32.totalorder %s88, %s89
      %p101 = scmp.eq.s32.totalorder %s23, 1
      %p102 = por %p100, %p101
      %p104 = scmp.ne.s32.totalorder %s89, %s103
      %p105 = scmp.eq.s32.totalorder %s23, 0
      %p106 = por %p104, %p105
      %s108 = sadd.s32 %s107, 1
      %p111 = scmp.eq.s32.totalorder %s17, 1
      %p112 = scmp.ne.s32.totalorder %s107, %s109
      %p113 = scmp.eq.s32.totalorder %s17, 0
      %p114 = por %p112, %p113
      %p115 = scmp.ne.s32.totalorder %s107, %s109
      %p116 = scmp.eq.s32.totalorder %s22, 1
      %p117 = por %p115, %p116
      %p118 = scmp.ne.s32.totalorder %s109, %s110
      %p119 = scmp.eq.s32.totalorder %s22, 0
      %p120 = por %p118, %p119
      %p121 = scmp.ne.s32.totalorder %s109, %s110
      %p122 = scmp.eq.s32.totalorder %s23, 1
      %p123 = por %p121, %p122
      %p125 = scmp.ne.s32.totalorder %s110, %s124
      %p126 = scmp.eq.s32.totalorder %s23, 0
      %p127 = por %p125, %p126
      %s129 = sadd.s32 %s128, 1
      %p132 = scmp.eq.s32.totalorder %s17, 1
      %p133 = scmp.ne.s32.totalorder %s128, %s130
      %p134 = scmp.eq.s32.totalorder %s17, 0
      %p135 = por %p133, %p134
      %p136 = scmp.ne.s32.totalorder %s128, %s130
      %p137 = scmp.eq.s32.totalorder %s22, 1
      %p138 = por %p136, %p137
      %p139 = scmp.ne.s32.totalorder %s130, %s131
      %p140 = scmp.eq.s32.totalorder %s22, 0
      %p141 = por %p139, %p140
      %p142 = scmp.ne.s32.totalorder %s130, %s131
      %p143 = scmp.eq.s32.totalorder %s23, 1
      %p144 = por %p142, %p143
      %p146 = scmp.ne.s32.totalorder %s131, %s145
      %p147 = scmp.eq.s32.totalorder %s23, 0
      %p148 = por %p146, %p147
      %s149 = ssub.s32 %s24, %s36
      %s150 = ssub.s32 %s25, %s32
      %s151 = sor.u32 %s149, %s150
      %p152 = scmp.eq.s32.totalorder %s151, 0
      %s154 = sadd.s32 %s153, 1
      %s155 = scalar_select %p152, %s153, %s154
      %p158 = pneg %p152
      %p159 = scmp.eq.s32.totalorder %s17, 1
      %p160 = por %p158, %p159
      %p161 = scmp.ne.s32.totalorder %s153, %s156
      %p162 = scmp.eq.s32.totalorder %s17, 0
      %p163 = por %p161, %p162
      %p164 = scmp.ne.s32.totalorder %s153, %s156
      %p165 = scmp.eq.s32.totalorder %s22, 1
      %p166 = por %p164, %p165
      %p167 = scmp.ne.s32.totalorder %s156, %s157
      %p168 = scmp.eq.s32.totalorder %s22, 0
      %p169 = por %p167, %p168
      %p170 = scmp.ne.s32.totalorder %s156, %s157
      %p171 = scmp.eq.s32.totalorder %s23, 1
      %p172 = por %p170, %p171
      %p174 = scmp.ne.s32.totalorder %s157, %s173
      %p175 = scmp.eq.s32.totalorder %s23, 0
      %p176 = por %p174, %p175
      %s177 = sadd.s32 %s24, %s25
      %s178 = sadd.s32 %s36, %s32
      %s179 = ssub.s32 %s177, %s178
      %p180 = scmp.eq.s32.totalorder %s179, 0
      %s182 = sadd.s32 %s181, 1
      %s183 = scalar_select %p180, %s181, %s182
      %p186 = pneg %p180
      %p187 = scmp.eq.s32.totalorder %s17, 1
      %p188 = por %p186, %p187
      %p189 = scmp.ne.s32.totalorder %s181, %s184
      %p190 = scmp.eq.s32.totalorder %s17, 0
      %p191 = por %p189, %p190
      %p192 = scmp.ne.s32.totalorder %s181, %s184
      %p193 = scmp.eq.s32.totalorder %s22, 1
      %p194 = por %p192, %p193
      %p195 = scmp.ne.s32.totalorder %s184, %s185
      %p196 = scmp.eq.s32.totalorder %s22, 0
      %p197 = por %p195, %p196
      %p198 = scmp.ne.s32.totalorder %s184, %s185
      %p199 = scmp.eq.s32.totalorder %s23, 1
      %p200 = por %p198, %p199
      %p202 = scmp.ne.s32.totalorder %s185, %s201
      %p203 = scmp.eq.s32.totalorder %s23, 0
      %p204 = por %p202, %p203
      %s205 = ssub.s32 %s24, %s36
      %s206 = ssub.s32 %s25, %s32
      %s207 = sor.u32 %s205, %s206
      %p208 = scmp.eq.s32.totalorder %s207, 0
      %s210 = sadd.s32 %s209, 1
      %s211 = scalar_select %p208, %s209, %s210
      %p214 = pneg %p208
      %p215 = scmp.eq.s32.totalorder %s17, 1
      %p216 = por %p214, %p215
      %p217 = scmp.ne.s32.totalorder %s209, %s212
      %p218 = scmp.eq.s32.totalorder %s17, 0
      %p219 = por %p217, %p218
      %p220 = scmp.ne.s32.totalorder %s209, %s212
      %p221 = scmp.eq.s32.totalorder %s22, 1
      %p222 = por %p220, %p221
      %p223 = scmp.ne.s32.totalorder %s212, %s213
      %p224 = scmp.eq.s32.totalorder %s22, 0
      %p225 = por %p223, %p224
      %p226 = scmp.ne.s32.totalorder %s212, %s213
      %p227 = scmp.eq.s32.totalorder %s23, 1
      %p228 = por %p226, %p227
      %p230 = scmp.ne.s32.totalorder %s213, %s229
      %p231 = scmp.eq.s32.totalorder %s23, 0
      %p232 = por %p230, %p231
      %p233 = scmp.le.s32.totalorder 1, %s17
      %p234 = scmp.lt.s32.totalorder %s17, 3
      %p235 = pnand %p233, %p234
      %p236 = pneg %p235
      // Predicated region
      $region9: #{head_v3_tiny_forward.1} parent=5 // pred_check
        _
      $region10: #{head_v3_tiny_forward.1} parent=5 // pred_check_branch
        %238 = sbr.rel (%p235) target = $region12
      $region11: #{head_v3_tiny_forward.1} parent=5 // pred_region
        %s239 = ssub.s32 %s17, 1
        // Predicated region
        $region13: #{head_v3_tiny_forward.1} parent=11 // pred_check
          %p240 = pneg %p78
        $region14: #{head_v3_tiny_forward.1} parent=11 // pred_check_branch
          %242 = sbr.rel (%p240) target = $region16
        $region15: #{head_v3_tiny_forward.1} parent=11 // pred_region
          _
        $region16: #{head_v3_tiny_forward.1} parent=11 // pred_fallthru
          _
        // Predicated region
        $region17: #{head_v3_tiny_forward.1} parent=11 // pred_check
          %p243 = pneg %p99
        $region18: #{head_v3_tiny_forward.1} parent=11 // pred_check_branch
          %245 = sbr.rel (%p243) target = $region20
        $region19: #{head_v3_tiny_forward.1} parent=11 // pred_region
          _
        $region20: #{head_v3_tiny_forward.1} parent=11 // pred_fallthru
          _
        // Predicated region
        $region21: #{head_v3_tiny_forward.1} parent=11 // pred_check
          %p246 = pneg %p120
        $region22: #{head_v3_tiny_forward.1} parent=11 // pred_check_branch
          %248 = sbr.rel (%p246) target = $region24
        $region23: #{head_v3_tiny_forward.1} parent=11 // pred_region
          _
        $region24: #{head_v3_tiny_forward.1} parent=11 // pred_fallthru
          _
        // Predicated region
        $region25: #{head_v3_tiny_forward.1} parent=11 // pred_check
          %p249 = pneg %p141
        $region26: #{head_v3_tiny_forward.1} parent=11 // pred_check_branch
          %251 = sbr.rel (%p249) target = $region28
        $region27: #{head_v3_tiny_forward.1} parent=11 // pred_region
          _
        $region28: #{head_v3_tiny_forward.1} parent=11 // pred_fallthru
          _
      $region12: #{head_v3_tiny_forward.1} parent=5 // pred_fallthru
        _
      %p252 = scmp.lt.s32.totalorder %s17, 2
      // Predicated region
      $region29: #{head_v3_tiny_forward.1} parent=5 // pred_check
        %p253 = pneg %p252
      $region30: #{head_v3_tiny_forward.1} parent=5 // pred_check_branch
        %255 = sbr.rel (%p253) target = $region32
      $region31: #{head_v3_tiny_forward.1} parent=5 // pred_region
        // Predicated region
        $region33: #{head_v3_tiny_forward.1} parent=31 // pred_check
          %p256 = pneg %p51
        $region34: #{head_v3_tiny_forward.1} parent=31 // pred_check_branch
          %258 = sbr.rel (%p256) target = $region36
        $region35: #{head_v3_tiny_forward.1} parent=31 // pred_region
          %s259 = sadd.s32 %s24, %s25
          %s260 = smul.u32 8, %s259
          %p261 = scmp.lt.s32.totalorder %s260, 15
          %s262 = scalar_select %p261, %s260, 15
          %s263 = smul.addr %s262, 2
          %s264 = smul.addr %s263, 4
          %s265 = scalar_lea.vmem %s0, %s264
          %s266 = sadd.s32 %s24, %s25
          %s267 = smul.u32 8, %s266
        $region36: #{head_v3_tiny_forward.1} parent=31 // pred_fallthru
          _
        // Predicated region
        $region37: #{head_v3_tiny_forward.1} parent=31 // pred_check
          %p268 = pneg %p163
        $region38: #{head_v3_tiny_forward.1} parent=31 // pred_check_branch
          %270 = sbr.rel (%p268) target = $region40
        $region39: #{head_v3_tiny_forward.1} parent=31 // pred_region
          %s271 = smul.u32 8, %s25
          %p272 = scmp.lt.s32.totalorder %s24, 1
          %s273 = scalar_select %p272, %s24, 1
          %p274 = scmp.lt.s32.totalorder %s271, 7
          %s275 = scalar_select %p274, %s271, 7
          %s276 = smul.addr %s275, 8
          %s277 = smul.addr %s273, 64
          %s278 = sadd.s32 %s276, %s277
          %s279 = smul.addr %s278, 8
          %s280 = scalar_lea.vmem %s5, %s279
          %s281 = smul.u32 8, %s25
        $region40: #{head_v3_tiny_forward.1} parent=31 // pred_fallthru
          _
      $region32: #{head_v3_tiny_forward.1} parent=5 // pred_fallthru
        _
      %p282 = scmp.le.s32.totalorder 1, %s17
      %p283 = scmp.lt.s32.totalorder %s17, 3
      %p284 = pnand %p282, %p283
      %p285 = pneg %p284
      // Predicated region
      $region41: #{head_v3_tiny_forward.1} parent=5 // pred_check
        _
      $region42: #{head_v3_tiny_forward.1} parent=5 // pred_check_branch
        %287 = sbr.rel (%p284) target = $region44
      $region43: #{head_v3_tiny_forward.1} parent=5 // pred_region
        %s288 = ssub.s32 %s17, 1
        %s289 = sadd.s32 %s26, %s27
        %s290 = smul.u32 8, %s289
        %p291 = scmp.lt.s32.totalorder %s290, 15
        %s292 = scalar_select %p291, %s290, 15
        %s293 = smul.addr %s292, 2
        %s294 = smul.addr %s293, 4
        %s295 = scalar_lea.vmem %s0, %s294
        %p296 = pneg %p57
        %p297 = pneg %p54
        %p298 = pneg %p78
        %p299 = pneg %p75
        %p300 = pneg %p99
        %p301 = pneg %p96
        %p302 = pneg %p120
        %p303 = pneg %p117
        %p304 = pneg %p141
        %p305 = pneg %p138
        %s306 = smul.u32 8, %s27
        %p307 = scmp.lt.s32.totalorder %s26, 1
        %s308 = scalar_select %p307, %s26, 1
        %p309 = scmp.lt.s32.totalorder %s306, 7
        %s310 = scalar_select %p309, %s306, 7
        %s311 = smul.addr %s310, 8
        %s312 = smul.addr %s308, 64
        %s313 = sadd.s32 %s311, %s312
        %s314 = smul.addr %s313, 8
        %s315 = scalar_lea.vmem %s5, %s314
        %p316 = pneg %p169
        %p317 = pneg %p166
        %p318 = pneg %p197
        %p319 = pneg %p194
        %s320 = sand.u32 %s184, 1
        %s321 = scalar_lea.sflag [#allocation3], %s320
        %s322 = sand.u32 %s184, 1
        %s323 = smul.addr %s322, 128
        %s324 = scalar_lea.vmem [#allocation2], %s323
        %p325 = pneg %p225
        %p326 = pneg %p222
        %s327 = smul.u32 8, %s27
        %p328 = scmp.lt.s32.totalorder %s26, 1
        %s329 = scalar_select %p328, %s26, 1
        %p330 = scmp.lt.s32.totalorder %s327, 7
        %s331 = scalar_select %p330, %s327, 7
        %s332 = smul.addr %s331, 12
        %s333 = smul.addr %s329, 96
        %s334 = sadd.s32 %s332, %s333
        %s335 = smul.addr %s334, 8
        %s336 = scalar_lea.vmem %s7, %s335
        %s337 = sadd.s32 %s26, %s27
        %s338 = smul.u32 8, %s337
        %p339 = scmp.lt.s32.totalorder %s338, 15
        %s340 = scalar_select %p339, %s338, 15
        %s341 = smul.addr %s340, 2
        %s342 = smul.addr %s341, 4
        %s343 = scalar_lea.vmem %s0, %s342
        %s344 = sadd.s32 %s26, %s27
        %s345 = smul.u32 8, %s344
        %s346 = smul.u32 8, %s27
        %p347 = scmp.lt.s32.totalorder %s26, 1
        %s348 = scalar_select %p347, %s26, 1
        %p349 = scmp.lt.s32.totalorder %s346, 7
        %s350 = scalar_select %p349, %s346, 7
        %s351 = smul.addr %s350, 8
        %s352 = smul.addr %s348, 64
        %s353 = sadd.s32 %s351, %s352
        %s354 = smul.addr %s353, 8
        %s355 = scalar_lea.vmem %s5, %s354
        %s356 = smul.u32 8, %s27
        %s357 = sadd.s32 %s26, %s27
        %s358 = smul.u32 8, %s357
        %s359 = smul.u32 8, %s27
        %p360 = scmp.lt.s32.totalorder %s26, 1
        %s361 = scalar_select %p360, %s26, 1
        %p362 = scmp.lt.s32.totalorder %s359, 7
        %s363 = scalar_select %p362, %s359, 7
        %s364 = smul.addr %s363, 12
        %s365 = smul.addr %s361, 96
        %s366 = sadd.s32 %s364, %s365
        %s367 = smul.addr %s366, 8
        %s368 = scalar_lea.vmem %s7, %s367
        %s369 = smul.u32 8, %s27
        %v371 = vld [vmem:[%s343] sm:$0xff]
        %v372 = vld [vmem:[%s343 + $0x8] sm:$0xff]
        %v373 = vld [vmem:[%s343 + $0x10] sm:$0xff]
        %v374 = vld [vmem:[%s343 + $0x18] sm:$0xff]
        %v375 = vld [vmem:[%s343 + $0x20] sm:$0xff]
        %v376 = vld [vmem:[%s343 + $0x28] sm:$0xff]
        %v377 = vld [vmem:[%s343 + $0x30] sm:$0xff]
        %v378 = vld [vmem:[%s343 + $0x38] sm:$0xff]
        %v379 = vld [vmem:[%s1] sm:$0xff]
        %v380 = vld [vmem:[%s1 + $0x8] sm:$0xff]
        %v381 = vld [vmem:[%s1 + $0x10] sm:$0xff]
        %v382 = vld [vmem:[%s1 + $0x18] sm:$0xff]
        %v383 = vld [vmem:[%s1 + $0x20] sm:$0xff]
        %v384 = vld [vmem:[%s1 + $0x28] sm:$0xff]
        %v385 = vld [vmem:[%s1 + $0x30] sm:$0xff]
        %v386 = vld [vmem:[%s1 + $0x38] sm:$0xff]
        %v387 = vld [vmem:[%s1 + $0x40] sm:$0xff]
        %v388 = vld [vmem:[%s1 + $0x48] sm:$0xff]
        %v389 = vld [vmem:[%s1 + $0x50] sm:$0xff]
        %v390 = vld [vmem:[%s1 + $0x58] sm:$0xff]
        %v391 = vld [vmem:[%s1 + $0x60] sm:$0xff]
        %v392 = vld [vmem:[%s1 + $0x68] sm:$0xff]
        %v393 = vld [vmem:[%s1 + $0x70] sm:$0xff]
        %v394 = vld [vmem:[%s1 + $0x78] sm:$0xff]
        %v395 = vld [vmem:[%s1 + $0x80] sm:$0xff]
        %v396 = vld [vmem:[%s1 + $0x88] sm:$0xff]
        %v397 = vld [vmem:[%s1 + $0x90] sm:$0xff]
        %v398 = vld [vmem:[%s1 + $0x98] sm:$0xff]
        %v399 = vld [vmem:[%s1 + $0xa0] sm:$0xff]
        %v400 = vld [vmem:[%s1 + $0xa8] sm:$0xff]
        %v401 = vld [vmem:[%s1 + $0xb0] sm:$0xff]
        %v402 = vld [vmem:[%s1 + $0xb8] sm:$0xff]
        %v403 = vld [vmem:[%s1 + $0xc0] sm:$0xff]
        %v404 = vld [vmem:[%s1 + $0xc8] sm:$0xff]
        %v405 = vld [vmem:[%s1 + $0xd0] sm:$0xff]
        %v406 = vld [vmem:[%s1 + $0xd8] sm:$0xff]
        %v407 = vld [vmem:[%s1 + $0xe0] sm:$0xff]
        %v408 = vld [vmem:[%s1 + $0xe8] sm:$0xff]
        %v409 = vld [vmem:[%s1 + $0xf0] sm:$0xff]
        %v410 = vld [vmem:[%s1 + $0xf8] sm:$0xff]
        %v411 = vld [vmem:[%s2] sm:$0x3]
        %v413 = vlaneseq
        %v414 = vshrl.u32 %v413, 7
        %v415 = vsub.s32 0, %v414
        %v416 = vrot.slane %v411, %v415
        %v417 = vlaneseq
        %v418 = vshrl.u32 %v417, 7
        %v419 = vsub.s32 1, %v418
        %v420 = vrot.slane %v411, %v419
        %v431 = vunpack.c.l.b16 %v371
        %v432 = vunpack.c.h.b16 %v371
        %v433 = vunpack.c.l.b16 %v372
        %v434 = vunpack.c.h.b16 %v372
        %v435 = vunpack.c.l.b16 %v373
        %v436 = vunpack.c.h.b16 %v373
        %v437 = vunpack.c.l.b16 %v374
        %v438 = vunpack.c.h.b16 %v374
        %v439 = vunpack.c.l.b16 %v375
        %v440 = vunpack.c.h.b16 %v375
        %v441 = vunpack.c.l.b16 %v376
        %v442 = vunpack.c.h.b16 %v376
        %v443 = vunpack.c.l.b16 %v377
        %v444 = vunpack.c.h.b16 %v377
        %v445 = vunpack.c.l.b16 %v378
        %v446 = vunpack.c.h.b16 %v378
        %v447 = vpack.c.b16 %v433, %v431
        %v448 = vpack.c.b16 %v434, %v432
        %v449 = vpack.c.b16 %v437, %v435
        %v450 = vpack.c.b16 %v438, %v436
        %v451 = vpack.c.b16 %v441, %v439
        %v452 = vpack.c.b16 %v442, %v440
        %v453 = vpack.c.b16 %v445, %v443
        %v454 = vpack.c.b16 %v446, %v444
        %v495 = vunpack.c.l.b16 %v379
        %v496 = vunpack.c.h.b16 %v379
        %v497 = vunpack.c.l.b16 %v380
        %v498 = vunpack.c.h.b16 %v380
        %v499 = vunpack.c.l.b16 %v381
        %v500 = vunpack.c.h.b16 %v381
        %v501 = vunpack.c.l.b16 %v382
        %v502 = vunpack.c.h.b16 %v382
        %v503 = vunpack.c.l.b16 %v383
        %v504 = vunpack.c.h.b16 %v383
        %v505 = vunpack.c.l.b16 %v384
        %v506 = vunpack.c.h.b16 %v384
        %v507 = vunpack.c.l.b16 %v385
        %v508 = vunpack.c.h.b16 %v385
        %v509 = vunpack.c.l.b16 %v386
        %v510 = vunpack.c.h.b16 %v386
        %v511 = vunpack.c.l.b16 %v387
        %v512 = vunpack.c.h.b16 %v387
        %v513 = vunpack.c.l.b16 %v388
        %v514 = vunpack.c.h.b16 %v388
        %v515 = vunpack.c.l.b16 %v389
        %v516 = vunpack.c.h.b16 %v389
        %v517 = vunpack.c.l.b16 %v390
        %v518 = vunpack.c.h.b16 %v390
        %v519 = vunpack.c.l.b16 %v391
        %v520 = vunpack.c.h.b16 %v391
        %v521 = vunpack.c.l.b16 %v392
        %v522 = vunpack.c.h.b16 %v392
        %v523 = vunpack.c.l.b16 %v393
        %v524 = vunpack.c.h.b16 %v393
        %v525 = vunpack.c.l.b16 %v394
        %v526 = vunpack.c.h.b16 %v394
        %v527 = vunpack.c.l.b16 %v395
        %v528 = vunpack.c.h.b16 %v395
        %v529 = vunpack.c.l.b16 %v396
        %v530 = vunpack.c.h.b16 %v396
        %v531 = vunpack.c.l.b16 %v397
        %v532 = vunpack.c.h.b16 %v397
        %v533 = vunpack.c.l.b16 %v398
        %v534 = vunpack.c.h.b16 %v398
        %v535 = vunpack.c.l.b16 %v399
        %v536 = vunpack.c.h.b16 %v399
        %v537 = vunpack.c.l.b16 %v400
        %v538 = vunpack.c.h.b16 %v400
        %v539 = vunpack.c.l.b16 %v401
        %v540 = vunpack.c.h.b16 %v401
        %v541 = vunpack.c.l.b16 %v402
        %v542 = vunpack.c.h.b16 %v402
        %v543 = vunpack.c.l.b16 %v403
        %v544 = vunpack.c.h.b16 %v403
        %v545 = vunpack.c.l.b16 %v404
        %v546 = vunpack.c.h.b16 %v404
        %v547 = vunpack.c.l.b16 %v405
        %v548 = vunpack.c.h.b16 %v405
        %v549 = vunpack.c.l.b16 %v406
        %v550 = vunpack.c.h.b16 %v406
        %v551 = vunpack.c.l.b16 %v407
        %v552 = vunpack.c.h.b16 %v407
        %v553 = vunpack.c.l.b16 %v408
        %v554 = vunpack.c.h.b16 %v408
        %v555 = vunpack.c.l.b16 %v409
        %v556 = vunpack.c.h.b16 %v409
        %v557 = vunpack.c.l.b16 %v410
        %v558 = vunpack.c.h.b16 %v410
        %v559 = vpack.c.b16 %v497, %v495
        %v560 = vpack.c.b16 %v498, %v496
        %v561 = vpack.c.b16 %v501, %v499
        %v562 = vpack.c.b16 %v502, %v500
        %v563 = vpack.c.b16 %v505, %v503
        %v564 = vpack.c.b16 %v506, %v504
        %v565 = vpack.c.b16 %v509, %v507
        %v566 = vpack.c.b16 %v510, %v508
        %v567 = vpack.c.b16 %v513, %v511
        %v568 = vpack.c.b16 %v514, %v512
        %v569 = vpack.c.b16 %v517, %v515
        %v570 = vpack.c.b16 %v518, %v516
        %v571 = vpack.c.b16 %v521, %v519
        %v572 = vpack.c.b16 %v522, %v520
        %v573 = vpack.c.b16 %v525, %v523
        %v574 = vpack.c.b16 %v526, %v524
        %v575 = vpack.c.b16 %v529, %v527
        %v576 = vpack.c.b16 %v530, %v528
        %v577 = vpack.c.b16 %v533, %v531
        %v578 = vpack.c.b16 %v534, %v532
        %v579 = vpack.c.b16 %v537, %v535
        %v580 = vpack.c.b16 %v538, %v536
        %v581 = vpack.c.b16 %v541, %v539
        %v582 = vpack.c.b16 %v542, %v540
        %v583 = vpack.c.b16 %v545, %v543
        %v584 = vpack.c.b16 %v546, %v544
        %v585 = vpack.c.b16 %v549, %v547
        %v586 = vpack.c.b16 %v550, %v548
        %v587 = vpack.c.b16 %v553, %v551
        %v588 = vpack.c.b16 %v554, %v552
        %v589 = vpack.c.b16 %v557, %v555
        %v590 = vpack.c.b16 %v558, %v556
        %623 = vmatprep.subr.bf16.mxu0 %v560
        %624 = vmatpush1.bf16.msra.mxu0 %v559
        %625 = vmatprep.subr.bf16.mxu0 %v562
        %626 = vmatpush1.bf16.msra.mxu0 %v561
        %627 = vmatprep.subr.bf16.mxu0 %v564
        %628 = vmatpush1.bf16.msra.mxu0 %v563
        %629 = vmatprep.subr.bf16.mxu0 %v566
        %630 = vmatpush1.bf16.msra.mxu0 %v565
        %631 = vmatprep.subr.bf16.mxu0 %v568
        %632 = vmatpush1.bf16.msra.mxu0 %v567
        %633 = vmatprep.subr.bf16.mxu0 %v570
        %634 = vmatpush1.bf16.msra.mxu0 %v569
        %635 = vmatprep.subr.bf16.mxu0 %v572
        %636 = vmatpush1.bf16.msra.mxu0 %v571
        %637 = vmatprep.subr.bf16.mxu0 %v574
        %638 = vmatpush1.bf16.msra.mxu0 %v573
        %639 = vmatprep.subr.bf16.mxu0 %v576
        %640 = vmatpush1.bf16.msra.mxu0 %v575
        %641 = vmatprep.subr.bf16.mxu0 %v578
        %642 = vmatpush1.bf16.msra.mxu0 %v577
        %643 = vmatprep.subr.bf16.mxu0 %v580
        %644 = vmatpush1.bf16.msra.mxu0 %v579
        %645 = vmatprep.subr.bf16.mxu0 %v582
        %646 = vmatpush1.bf16.msra.mxu0 %v581
        %647 = vmatprep.subr.bf16.mxu0 %v584
        %648 = vmatpush1.bf16.msra.mxu0 %v583
        %649 = vmatprep.subr.bf16.mxu0 %v586
        %650 = vmatpush1.bf16.msra.mxu0 %v585
        %651 = vmatprep.subr.bf16.mxu0 %v588
        %652 = vmatpush1.bf16.msra.mxu0 %v587
        %653 = vmatprep.subr.bf16.mxu0 %v590
        %654 = vmatpush1.bf16.msra.mxu0 %v589
        %655 = vmatprep.mubr.bf16.mxu0 %v448
        %656 = vmatmul.mubr.bf16.gmra.mrb[0].mxu0 %v447
        %v657 = vpop.f32.mrb[0].mxu0
        %v658 = vadd.f32 %v416, %v657
        %v659 = vpop.f32.mrb[0].mxu0
        %v660 = vadd.f32 %v420, %v659
        %v661 = vpop.f32.mrb[0].mxu0
        %v662 = vadd.f32 %v416, %v661
        %v663 = vpop.f32.mrb[0].mxu0
        %v664 = vadd.f32 %v420, %v663
        %665 = vmatprep.mubr.bf16.mxu0 %v450
        %666 = vmatmul.mubr.bf16.gmra.mrb[0].mxu0 %v449
        %v667 = vpop.f32.mrb[0].mxu0
        %v668 = vadd.f32 %v416, %v667
        %v669 = vpop.f32.mrb[0].mxu0
        %v670 = vadd.f32 %v420, %v669
        %v671 = vpop.f32.mrb[0].mxu0
        %v672 = vadd.f32 %v416, %v671
        %v673 = vpop.f32.mrb[0].mxu0
        %v674 = vadd.f32 %v420, %v673
        %675 = vmatprep.mubr.bf16.mxu0 %v452
        %676 = vmatmul.mubr.bf16.gmra.mrb[0].mxu0 %v451
        %v677 = vpop.f32.mrb[0].mxu0
        %v678 = vadd.f32 %v416, %v677
        %v679 = vpop.f32.mrb[0].mxu0
        %v680 = vadd.f32 %v420, %v679
        %v681 = vpop.f32.mrb[0].mxu0
        %v682 = vadd.f32 %v416, %v681
        %v683 = vpop.f32.mrb[0].mxu0
        %v684 = vadd.f32 %v420, %v683
        %685 = vmatprep.mubr.bf16.mxu0 %v454
        %686 = vmatmul.mubr.bf16.gmra.mrb[0].mxu0 %v453
        %v687 = vpop.f32.mrb[0].mxu0
        %v688 = vadd.f32 %v416, %v687
        %v689 = vpop.f32.mrb[0].mxu0
        %v690 = vadd.f32 %v420, %v689
        %v691 = vpop.f32.mrb[0].mxu0
        %v692 = vadd.f32 %v416, %v691
        %v693 = vpop.f32.mrb[0].mxu0
        %v694 = vadd.f32 %v420, %v693
        %695 = vdwg.mxu0
        %v696 = vmul.f32 %v658, 0.1
        %v697 = vmul.f32 %v660, 0.1
        %v698 = vmul.f32 %v662, 0.1
        %v699 = vmul.f32 %v664, 0.1
        %v700 = vmul.f32 %v668, 0.1
        %v701 = vmul.f32 %v670, 0.1
        %v702 = vmul.f32 %v672, 0.1
        %v703 = vmul.f32 %v674, 0.1
        %v704 = vmul.f32 %v678, 0.1
        %v705 = vmul.f32 %v680, 0.1
        %v706 = vmul.f32 %v682, 0.1
        %v707 = vmul.f32 %v684, 0.1
        %v708 = vmul.f32 %v688, 0.1
        %v709 = vmul.f32 %v690, 0.1
        %v710 = vmul.f32 %v692, 0.1
        %v711 = vmul.f32 %v694, 0.1
        %v712 = vmax.f32 %v658, %v696
        %v713 = vmax.f32 %v660, %v697
        %v714 = vmax.f32 %v662, %v698
        %v715 = vmax.f32 %v664, %v699
        %v716 = vmax.f32 %v668, %v700
        %v717 = vmax.f32 %v670, %v701
        %v718 = vmax.f32 %v672, %v702
        %v719 = vmax.f32 %v674, %v703
        %v720 = vmax.f32 %v678, %v704
        %v721 = vmax.f32 %v680, %v705
        %v722 = vmax.f32 %v682, %v706
        %v723 = vmax.f32 %v684, %v707
        %v724 = vmax.f32 %v688, %v708
        %v725 = vmax.f32 %v690, %v709
        %v726 = vmax.f32 %v692, %v710
        %v727 = vmax.f32 %v694, %v711
        %728 = vst [vmem:[%s324] sm:$0xff] %v712
        %729 = vst [vmem:[%s324 + $0x8] sm:$0xff] %v713
        %730 = vst [vmem:[%s324 + $0x10] sm:$0xff] %v714
        %731 = vst [vmem:[%s324 + $0x18] sm:$0xff] %v715
        %732 = vst [vmem:[%s324 + $0x20] sm:$0xff] %v716
        %733 = vst [vmem:[%s324 + $0x28] sm:$0xff] %v717
        %734 = vst [vmem:[%s324 + $0x30] sm:$0xff] %v718
        %735 = vst [vmem:[%s324 + $0x38] sm:$0xff] %v719
        %736 = vst [vmem:[%s324 + $0x40] sm:$0xff] %v720
        %737 = vst [vmem:[%s324 + $0x48] sm:$0xff] %v721
        %738 = vst [vmem:[%s324 + $0x50] sm:$0xff] %v722
        %739 = vst [vmem:[%s324 + $0x58] sm:$0xff] %v723
        %740 = vst [vmem:[%s324 + $0x60] sm:$0xff] %v724
        %741 = vst [vmem:[%s324 + $0x68] sm:$0xff] %v725
        %742 = vst [vmem:[%s324 + $0x70] sm:$0xff] %v726
        %743 = vst [vmem:[%s324 + $0x78] sm:$0xff] %v727
        %v744 = vpack.c.bf16 %v714, %v712
        %v745 = vpack.c.bf16 %v715, %v713
        %v746 = vpack.c.bf16 %v718, %v716
        %v747 = vpack.c.bf16 %v719, %v717
        %v748 = vpack.c.bf16 %v722, %v720
        %v749 = vpack.c.bf16 %v723, %v721
        %v750 = vpack.c.bf16 %v726, %v724
        %v751 = vpack.c.bf16 %v727, %v725
        %v752 = vld [vmem:[%s3] sm:$0xf]
        %v753 = vld [vmem:[%s3 + $0x4] sm:$0xf]
        %v754 = vld [vmem:[%s3 + $0x8] sm:$0xf]
        %v755 = vld [vmem:[%s3 + $0xc] sm:$0xf]
        %v756 = vld [vmem:[%s3 + $0x10] sm:$0xf]
        %v757 = vld [vmem:[%s3 + $0x14] sm:$0xf]
        %v758 = vld [vmem:[%s3 + $0x18] sm:$0xf]
        %v759 = vld [vmem:[%s3 + $0x1c] sm:$0xf]
        %v760 = vld [vmem:[%s3 + $0x20] sm:$0xf]
        %v761 = vld [vmem:[%s3 + $0x24] sm:$0xf]
        %v762 = vld [vmem:[%s3 + $0x28] sm:$0xf]
        %v763 = vld [vmem:[%s3 + $0x2c] sm:$0xf]
        %v764 = vld [vmem:[%s3 + $0x30] sm:$0xf]
        %v765 = vld [vmem:[%s3 + $0x34] sm:$0xf]
        %v766 = vld [vmem:[%s3 + $0x38] sm:$0xf]
        %v767 = vld [vmem:[%s3 + $0x3c] sm:$0xf]
        %v768 = vld [vmem:[%s3 + $0x40] sm:$0xf]
        %v769 = vld [vmem:[%s3 + $0x44] sm:$0xf]
        %v770 = vld [vmem:[%s3 + $0x48] sm:$0xf]
        %v771 = vld [vmem:[%s3 + $0x4c] sm:$0xf]
        %v772 = vld [vmem:[%s3 + $0x50] sm:$0xf]
        %v773 = vld [vmem:[%s3 + $0x54] sm:$0xf]
        %v774 = vld [vmem:[%s3 + $0x58] sm:$0xf]
        %v775 = vld [vmem:[%s3 + $0x5c] sm:$0xf]
        %v776 = vld [vmem:[%s3 + $0x60] sm:$0xf]
        %v777 = vld [vmem:[%s3 + $0x64] sm:$0xf]
        %v778 = vld [vmem:[%s3 + $0x68] sm:$0xf]
        %v779 = vld [vmem:[%s3 + $0x6c] sm:$0xf]
        %v780 = vld [vmem:[%s3 + $0x70] sm:$0xf]
        %v781 = vld [vmem:[%s3 + $0x74] sm:$0xf]
        %v782 = vld [vmem:[%s3 + $0x78] sm:$0xf]
        %v783 = vld [vmem:[%s3 + $0x7c] sm:$0xf]
        %v784 = vld [vmem:[%s4] sm:$0x1]
        %v786 = vlaneseq
        %v787 = vshrl.u32 %v786, 7
        %v788 = vsub.s32 0, %v787
        %v789 = vrot.slane %v784, %v788
        %v823 = vunpack.c.l.b16 %v752
        %v824 = vunpack.c.l.b16 %v753
        %v825 = vunpack.c.l.b16 %v754
        %v826 = vunpack.c.l.b16 %v755
        %v827 = vunpack.c.l.b16 %v756
        %v828 = vunpack.c.l.b16 %v757
        %v829 = vunpack.c.l.b16 %v758
        %v830 = vunpack.c.l.b16 %v759
        %v831 = vunpack.c.l.b16 %v760
        %v832 = vunpack.c.l.b16 %v761
        %v833 = vunpack.c.l.b16 %v762
        %v834 = vunpack.c.l.b16 %v763
        %v835 = vunpack.c.l.b16 %v764
        %v836 = vunpack.c.l.b16 %v765
        %v837 = vunpack.c.l.b16 %v766
        %v838 = vunpack.c.l.b16 %v767
        %v839 = vunpack.c.l.b16 %v768
        %v840 = vunpack.c.l.b16 %v769
        %v841 = vunpack.c.l.b16 %v770
        %v842 = vunpack.c.l.b16 %v771
        %v843 = vunpack.c.l.b16 %v772
        %v844 = vunpack.c.l.b16 %v773
        %v845 = vunpack.c.l.b16 %v774
        %v846 = vunpack.c.l.b16 %v775
        %v847 = vunpack.c.l.b16 %v776
        %v848 = vunpack.c.l.b16 %v777
        %v849 = vunpack.c.l.b16 %v778
        %v850 = vunpack.c.l.b16 %v779
        %v851 = vunpack.c.l.b16 %v780
        %v852 = vunpack.c.l.b16 %v781
        %v853 = vunpack.c.l.b16 %v782
        %v854 = vunpack.c.l.b16 %v783
        %v855 = vpack.c.b16 %v824, %v823
        %v856 = vpack.c.b16 %v826, %v825
        %v857 = vpack.c.b16 %v828, %v827
        %v858 = vpack.c.b16 %v830, %v829
        %v859 = vpack.c.b16 %v832, %v831
        %v860 = vpack.c.b16 %v834, %v833
        %v861 = vpack.c.b16 %v836, %v835
        %v862 = vpack.c.b16 %v838, %v837
        %v863 = vpack.c.b16 %v840, %v839
        %v864 = vpack.c.b16 %v842, %v841
        %v865 = vpack.c.b16 %v844, %v843
        %v866 = vpack.c.b16 %v846, %v845
        %v867 = vpack.c.b16 %v848, %v847
        %v868 = vpack.c.b16 %v850, %v849
        %v869 = vpack.c.b16 %v852, %v851
        %v870 = vpack.c.b16 %v854, %v853
        %887 = vmatprep.subr.bf16.mxu0 0
        %888 = vmatpush1.bf16.msra.mxu0 %v855
        %889 = vmatprep.subr.bf16.mxu0 0
        %890 = vmatpush1.bf16.msra.mxu0 %v856
        %891 = vmatprep.subr.bf16.mxu0 0
        %892 = vmatpush1.bf16.msra.mxu0 %v857
        %893 = vmatprep.subr.bf16.mxu0 0
        %894 = vmatpush1.bf16.msra.mxu0 %v858
        %895 = vmatprep.subr.bf16.mxu0 0
        %896 = vmatpush1.bf16.msra.mxu0 %v859
        %897 = vmatprep.subr.bf16.mxu0 0
        %898 = vmatpush1.bf16.msra.mxu0 %v860
        %899 = vmatprep.subr.bf16.mxu0 0
        %900 = vmatpush1.bf16.msra.mxu0 %v861
        %901 = vmatprep.subr.bf16.mxu0 0
        %902 = vmatpush1.bf16.msra.mxu0 %v862
        %903 = vmatprep.subr.bf16.mxu0 0
        %904 = vmatpush1.bf16.msra.mxu0 %v863
        %905 = vmatprep.subr.bf16.mxu0 0
        %906 = vmatpush1.bf16.msra.mxu0 %v864
        %907 = vmatprep.subr.bf16.mxu0 0
        %908 = vmatpush1.bf16.msra.mxu0 %v865
        %909 = vmatprep.subr.bf16.mxu0 0
        %910 = vmatpush1.bf16.msra.mxu0 %v866
        %911 = vmatprep.subr.bf16.mxu0 0
        %912 = vmatpush1.bf16.msra.mxu0 %v867
        %913 = vmatprep.subr.bf16.mxu0 0
        %914 = vmatpush1.bf16.msra.mxu0 %v868
        %915 = vmatprep.subr.bf16.mxu0 0
        %916 = vmatpush1.bf16.msra.mxu0 %v869
        %917 = vmatprep.subr.bf16.mxu0 0
        %918 = vmatpush1.bf16.msra.mxu0 %v870
        %919 = vmatprep.mubr.bf16.mxu0 %v745
        %920 = vmatmul.mubr.bf16.gmra.mrb[0].mxu0 %v744
        %v921 = vpop.f32.mrb[0].mxu0
        %v922 = vadd.f32 %v789, %v921
        %v923 = vpop.f32.mrb[0].mxu0
        %v924 = vpop.f32.mrb[0].mxu0
        %v925 = vadd.f32 %v789, %v924
        %v926 = vpop.f32.mrb[0].mxu0
        %927 = vmatprep.mubr.bf16.mxu0 %v747
        %928 = vmatmul.mubr.bf16.gmra.mrb[0].mxu0 %v746
        %v929 = vpop.f32.mrb[0].mxu0
        %v930 = vadd.f32 %v789, %v929
        %v931 = vpop.f32.mrb[0].mxu0
        %v932 = vpop.f32.mrb[0].mxu0
        %v933 = vadd.f32 %v789, %v932
        %v934 = vpop.f32.mrb[0].mxu0
        %935 = vmatprep.mubr.bf16.mxu0 %v749
        %936 = vmatmul.mubr.bf16.gmra.mrb[0].mxu0 %v748
        %v937 = vpop.f32.mrb[0].mxu0
        %v938 = vadd.f32 %v789, %v937
        %v939 = vpop.f32.mrb[0].mxu0
        %v940 = vpop.f32.mrb[0].mxu0
        %v941 = vadd.f32 %v789, %v940
        %v942 = vpop.f32.mrb[0].mxu0
        %943 = vmatprep.mubr.bf16.mxu0 %v751
        %944 = vmatmul.mubr.bf16.gmra.mrb[0].mxu0 %v750
        %v945 = vpop.f32.mrb[0].mxu0
        %v946 = vadd.f32 %v789, %v945
        %v947 = vpop.f32.mrb[0].mxu0
        %v948 = vpop.f32.mrb[0].mxu0
        %v949 = vadd.f32 %v789, %v948
        %v950 = vpop.f32.mrb[0].mxu0
        %951 = vdwg.mxu0
        %v952 = vmul.f32 %v922, 0.1
        %v953 = vmul.f32 %v925, 0.1
        %v954 = vmul.f32 %v930, 0.1
        %v955 = vmul.f32 %v933, 0.1
        %v956 = vmul.f32 %v938, 0.1
        %v957 = vmul.f32 %v941, 0.1
        %v958 = vmul.f32 %v946, 0.1
        %v959 = vmul.f32 %v949, 0.1
        %v960 = vmax.f32 %v922, %v952
        %v961 = vmax.f32 %v925, %v953
        %v962 = vmax.f32 %v930, %v954
        %v963 = vmax.f32 %v933, %v955
        %v964 = vmax.f32 %v938, %v956
        %v965 = vmax.f32 %v941, %v957
        %v966 = vmax.f32 %v946, %v958
        %v967 = vmax.f32 %v949, %v959
        %968 = vst [vmem:[%s368] sm:$0xff] %v960
        %969 = vst [vmem:[%s368 + $0x60] sm:$0xff] %v961
        %970 = vst [vmem:[%s368 + $0xc0] sm:$0xff] %v962
        %971 = vst [vmem:[%s368 + $0x120] sm:$0xff] %v963
        %972 = vst [vmem:[%s368 + $0x180] sm:$0xff] %v964
        %973 = vst [vmem:[%s368 + $0x1e0] sm:$0xff] %v965
        %974 = vst [vmem:[%s368 + $0x240] sm:$0xff] %v966
        %975 = vst [vmem:[%s368 + $0x2a0] sm:$0xff] %v967
        %976 = vst [vmem:[%s368 + $0x18] sm:$0xff] %v960
        %977 = vst [vmem:[%s368 + $0x78] sm:$0xff] %v961
        %978 = vst [vmem:[%s368 + $0xd8] sm:$0xff] %v962
        %979 = vst [vmem:[%s368 + $0x138] sm:$0xff] %v963
        %980 = vst [vmem:[%s368 + $0x198] sm:$0xff] %v964
        %981 = vst [vmem:[%s368 + $0x1f8] sm:$0xff] %v965
        %982 = vst [vmem:[%s368 + $0x258] sm:$0xff] %v966
        %983 = vst [vmem:[%s368 + $0x2b8] sm:$0xff] %v967
        %s984 = scalar_lea.vmem %s368, 48
        %985 = vst [vmem:[%s984] sm:$0xff] %v960
        %986 = vst [vmem:[%s984 + $0x60] sm:$0xff] %v961
        %987 = vst [vmem:[%s984 + $0xc0] sm:$0xff] %v962
        %988 = vst [vmem:[%s984 + $0x120] sm:$0xff] %v963
        %989 = vst [vmem:[%s984 + $0x180] sm:$0xff] %v964
        %990 = vst [vmem:[%s984 + $0x1e0] sm:$0xff] %v965
        %991 = vst [vmem:[%s984 + $0x240] sm:$0xff] %v966
        %992 = vst [vmem:[%s984 + $0x2a0] sm:$0xff] %v967
        %993 = vst [vmem:[%s984 + $0x18] sm:$0xff] %v960
        %994 = vst [vmem:[%s984 + $0x78] sm:$0xff] %v961
        %995 = vst [vmem:[%s984 + $0xd8] sm:$0xff] %v962
        %996 = vst [vmem:[%s984 + $0x138] sm:$0xff] %v963
        %997 = vst [vmem:[%s984 + $0x198] sm:$0xff] %v964
        %998 = vst [vmem:[%s984 + $0x1f8] sm:$0xff] %v965
        %999 = vst [vmem:[%s984 + $0x258] sm:$0xff] %v966
        %1000 = vst [vmem:[%s984 + $0x2b8] sm:$0xff] %v967
        %v1001 = vld [vmem:[%s355] sm:$0xff]
        %v1002 = vld [vmem:[%s355 + $0x8] sm:$0xff]
        %v1003 = vld [vmem:[%s355 + $0x20] sm:$0xff]
        %v1004 = vld [vmem:[%s355 + $0x28] sm:$0xff]
        %v1005 = vld [vmem:[%s355 + $0x40] sm:$0xff]
        %v1006 = vld [vmem:[%s355 + $0x48] sm:$0xff]
        %v1007 = vld [vmem:[%s355 + $0x60] sm:$0xff]
        %v1008 = vld [vmem:[%s355 + $0x68] sm:$0xff]
        %v1009 = vld [vmem:[%s355 + $0x80] sm:$0xff]
        %v1010 = vld [vmem:[%s355 + $0x88] sm:$0xff]
        %v1011 = vld [vmem:[%s355 + $0xa0] sm:$0xff]
        %v1012 = vld [vmem:[%s355 + $0xa8] sm:$0xff]
        %v1013 = vld [vmem:[%s355 + $0xc0] sm:$0xff]
        %v1014 = vld [vmem:[%s355 + $0xc8] sm:$0xff]
        %v1015 = vld [vmem:[%s355 + $0xe0] sm:$0xff]
        %v1016 = vld [vmem:[%s355 + $0xe8] sm:$0xff]
        %v1017 = vld [vmem:[%s355 + $0x100] sm:$0xff]
        %v1018 = vld [vmem:[%s355 + $0x108] sm:$0xff]
        %v1019 = vld [vmem:[%s355 + $0x120] sm:$0xff]
        %v1020 = vld [vmem:[%s355 + $0x128] sm:$0xff]
        %v1021 = vld [vmem:[%s355 + $0x140] sm:$0xff]
        %v1022 = vld [vmem:[%s355 + $0x148] sm:$0xff]
        %v1023 = vld [vmem:[%s355 + $0x160] sm:$0xff]
        %v1024 = vld [vmem:[%s355 + $0x168] sm:$0xff]
        %v1025 = vld [vmem:[%s355 + $0x180] sm:$0xff]
        %v1026 = vld [vmem:[%s355 + $0x188] sm:$0xff]
        %v1027 = vld [vmem:[%s355 + $0x1a0] sm:$0xff]
        %v1028 = vld [vmem:[%s355 + $0x1a8] sm:$0xff]
        %v1029 = vld [vmem:[%s355 + $0x1c0] sm:$0xff]
        %v1030 = vld [vmem:[%s355 + $0x1c8] sm:$0xff]
        %v1031 = vld [vmem:[%s355 + $0x1e0] sm:$0xff]
        %v1032 = vld [vmem:[%s355 + $0x1e8] sm:$0xff]
        %1033 = vst [vmem:[%s368 + $0x8] sm:$0xff] %v1001
        %1034 = vst [vmem:[%s368 + $0x10] sm:$0xff] %v1002
        %1035 = vst [vmem:[%s368 + $0x38] sm:$0xff] %v1003
        %1036 = vst [vmem:[%s368 + $0x40] sm:$0xff] %v1004
        %1037 = vst [vmem:[%s368 + $0x68] sm:$0xff] %v1005
        %1038 = vst [vmem:[%s368 + $0x70] sm:$0xff] %v1006
        %1039 = vst [vmem:[%s368 + $0x98] sm:$0xff] %v1007
        %1040 = vst [vmem:[%s368 + $0xa0] sm:$0xff] %v1008
        %1041 = vst [vmem:[%s368 + $0xc8] sm:$0xff] %v1009
        %1042 = vst [vmem:[%s368 + $0xd0] sm:$0xff] %v1010
        %1043 = vst [vmem:[%s368 + $0xf8] sm:$0xff] %v1011
        %1044 = vst [vmem:[%s368 + $0x100] sm:$0xff] %v1012
        %1045 = vst [vmem:[%s368 + $0x128] sm:$0xff] %v1013
        %1046 = vst [vmem:[%s368 + $0x130] sm:$0xff] %v1014
        %1047 = vst [vmem:[%s368 + $0x158] sm:$0xff] %v1015
        %1048 = vst [vmem:[%s368 + $0x160] sm:$0xff] %v1016
        %1049 = vst [vmem:[%s368 + $0x188] sm:$0xff] %v1017
        %1050 = vst [vmem:[%s368 + $0x190] sm:$0xff] %v1018
        %1051 = vst [vmem:[%s368 + $0x1b8] sm:$0xff] %v1019
        %1052 = vst [vmem:[%s368 + $0x1c0] sm:$0xff] %v1020
        %1053 = vst [vmem:[%s368 + $0x1e8] sm:$0xff] %v1021
        %1054 = vst [vmem:[%s368 + $0x1f0] sm:$0xff] %v1022
        %1055 = vst [vmem:[%s368 + $0x218] sm:$0xff] %v1023
        %1056 = vst [vmem:[%s368 + $0x220] sm:$0xff] %v1024
        %1057 = vst [vmem:[%s368 + $0x248] sm:$0xff] %v1025
        %1058 = vst [vmem:[%s368 + $0x250] sm:$0xff] %v1026
        %1059 = vst [vmem:[%s368 + $0x278] sm:$0xff] %v1027
        %1060 = vst [vmem:[%s368 + $0x280] sm:$0xff] %v1028
        %1061 = vst [vmem:[%s368 + $0x2a8] sm:$0xff] %v1029
        %1062 = vst [vmem:[%s368 + $0x2b0] sm:$0xff] %v1030
        %1063 = vst [vmem:[%s368 + $0x2d8] sm:$0xff] %v1031
        %1064 = vst [vmem:[%s368 + $0x2e0] sm:$0xff] %v1032
        %v1065 = vld [vmem:[%s355 + $0x10] sm:$0xff]
        %v1066 = vld [vmem:[%s355 + $0x18] sm:$0xff]
        %v1067 = vld [vmem:[%s355 + $0x30] sm:$0xff]
        %v1068 = vld [vmem:[%s355 + $0x38] sm:$0xff]
        %v1069 = vld [vmem:[%s355 + $0x50] sm:$0xff]
        %v1070 = vld [vmem:[%s355 + $0x58] sm:$0xff]
        %v1071 = vld [vmem:[%s355 + $0x70] sm:$0xff]
        %v1072 = vld [vmem:[%s355 + $0x78] sm:$0xff]
        %v1073 = vld [vmem:[%s355 + $0x90] sm:$0xff]
        %v1074 = vld [vmem:[%s355 + $0x98] sm:$0xff]
        %v1075 = vld [vmem:[%s355 + $0xb0] sm:$0xff]
        %v1076 = vld [vmem:[%s355 + $0xb8] sm:$0xff]
        %v1077 = vld [vmem:[%s355 + $0xd0] sm:$0xff]
        %v1078 = vld [vmem:[%s355 + $0xd8] sm:$0xff]
        %v1079 = vld [vmem:[%s355 + $0xf0] sm:$0xff]
        %v1080 = vld [vmem:[%s355 + $0xf8] sm:$0xff]
        %v1081 = vld [vmem:[%s355 + $0x110] sm:$0xff]
        %v1082 = vld [vmem:[%s355 + $0x118] sm:$0xff]
        %v1083 = vld [vmem:[%s355 + $0x130] sm:$0xff]
        %v1084 = vld [vmem:[%s355 + $0x138] sm:$0xff]
        %v1085 = vld [vmem:[%s355 + $0x150] sm:$0xff]
        %v1086 = vld [vmem:[%s355 + $0x158] sm:$0xff]
        %v1087 = vld [vmem:[%s355 + $0x170] sm:$0xff]
        %v1088 = vld [vmem:[%s355 + $0x178] sm:$0xff]
        %v1089 = vld [vmem:[%s355 + $0x190] sm:$0xff]
        %v1090 = vld [vmem:[%s355 + $0x198] sm:$0xff]
        %v1091 = vld [vmem:[%s355 + $0x1b0] sm:$0xff]
        %v1092 = vld [vmem:[%s355 + $0x1b8] sm:$0xff]
        %v1093 = vld [vmem:[%s355 + $0x1d0] sm:$0xff]
        %v1094 = vld [vmem:[%s355 + $0x1d8] sm:$0xff]
        %v1095 = vld [vmem:[%s355 + $0x1f0] sm:$0xff]
        %v1096 = vld [vmem:[%s355 + $0x1f8] sm:$0xff]
        %1097 = vst [vmem:[%s368 + $0x20] sm:$0xff] %v1065
        %1098 = vst [vmem:[%s368 + $0x28] sm:$0xff] %v1066
        %1099 = vst [vmem:[%s368 + $0x50] sm:$0xff] %v1067
        %1100 = vst [vmem:[%s368 + $0x58] sm:$0xff] %v1068
        %1101 = vst [vmem:[%s368 + $0x80] sm:$0xff] %v1069
        %1102 = vst [vmem:[%s368 + $0x88] sm:$0xff] %v1070
        %1103 = vst [vmem:[%s368 + $0xb0] sm:$0xff] %v1071
        %1104 = vst [vmem:[%s368 + $0xb8] sm:$0xff] %v1072
        %1105 = vst [vmem:[%s368 + $0xe0] sm:$0xff] %v1073
        %1106 = vst [vmem:[%s368 + $0xe8] sm:$0xff] %v1074
        %1107 = vst [vmem:[%s368 + $0x110] sm:$0xff] %v1075
        %1108 = vst [vmem:[%s368 + $0x118] sm:$0xff] %v1076
        %1109 = vst [vmem:[%s368 + $0x140] sm:$0xff] %v1077
        %1110 = vst [vmem:[%s368 + $0x148] sm:$0xff] %v1078
        %1111 = vst [vmem:[%s368 + $0x170] sm:$0xff] %v1079
        %1112 = vst [vmem:[%s368 + $0x178] sm:$0xff] %v1080
        %1113 = vst [vmem:[%s368 + $0x1a0] sm:$0xff] %v1081
        %1114 = vst [vmem:[%s368 + $0x1a8] sm:$0xff] %v1082
        %1115 = vst [vmem:[%s368 + $0x1d0] sm:$0xff] %v1083
        %1116 = vst [vmem:[%s368 + $0x1d8] sm:$0xff] %v1084
        %1117 = vst [vmem:[%s368 + $0x200] sm:$0xff] %v1085
        %1118 = vst [vmem:[%s368 + $0x208] sm:$0xff] %v1086
        %1119 = vst [vmem:[%s368 + $0x230] sm:$0xff] %v1087
        %1120 = vst [vmem:[%s368 + $0x238] sm:$0xff] %v1088
        %1121 = vst [vmem:[%s368 + $0x260] sm:$0xff] %v1089
        %1122 = vst [vmem:[%s368 + $0x268] sm:$0xff] %v1090
        %1123 = vst [vmem:[%s368 + $0x290] sm:$0xff] %v1091
        %1124 = vst [vmem:[%s368 + $0x298] sm:$0xff] %v1092
        %1125 = vst [vmem:[%s368 + $0x2c0] sm:$0xff] %v1093
        %1126 = vst [vmem:[%s368 + $0x2c8] sm:$0xff] %v1094
        %1127 = vst [vmem:[%s368 + $0x2f0] sm:$0xff] %v1095
        %1128 = vst [vmem:[%s368 + $0x2f8] sm:$0xff] %v1096
        %s1129 = sand.u32 %s184, 1
        %s1130 = scalar_lea.sflag [#allocation3], %s1129
        %s1131 = sand.u32 %s184, 1
        %s1132 = smul.addr %s1131, 128
        %s1133 = scalar_lea.vmem [#allocation2], %s1132
        %s1134 = smul.u32 8, %s27
        %p1135 = scmp.lt.s32.totalorder %s26, 1
        %s1136 = scalar_select %p1135, %s26, 1
        %p1137 = scmp.lt.s32.totalorder %s1134, 7
        %s1138 = scalar_select %p1137, %s1134, 7
        %s1139 = smul.addr %s1138, 12
        %s1140 = smul.addr %s1136, 96
        %s1141 = sadd.s32 %s1139, %s1140
        %s1142 = smul.addr %s1141, 8
        %s1143 = scalar_lea.vmem %s7, %s1142
        // Predicated region
        $region45: #{head_v3_tiny_forward.1} parent=43 // pred_check
          %p1144 = pneg %p194
        $region46: #{head_v3_tiny_forward.1} parent=43 // pred_check_branch
          %1146 = sbr.rel (%p1144) target = $region48
        $region47: #{head_v3_tiny_forward.1} parent=43 // pred_region
          %s1147 = sadd.s32 %s26, %s27
          %s1148 = smul.u32 8, %s1147
          %s1150 = ssub.s32 2048, 2048
          %1151 = vsyncadd %s1130, %s1150
          %s1152 = smul.addr %s1148, 2
          %s1153 = smul.addr %s1152, 128
          %s1154 = scalar_lea.hbm %s6, %s1153
          %s1155 = sshll.u32 %s1133, 4
          %s1156 = int_to_ptr.vmem [resolvable:$true] %s1155
          %1161 = dma.vmem_to_hbm [thread:$0]  %s1156, 2048, %s1154, %s1130, 256, 256, 16
        $region48: #{head_v3_tiny_forward.1} parent=43 // pred_fallthru
          _
        // Predicated region
        $region49: #{head_v3_tiny_forward.1} parent=43 // pred_check
          %p1162 = pneg %p222
        $region50: #{head_v3_tiny_forward.1} parent=43 // pred_check_branch
          %1164 = sbr.rel (%p1162) target = $region52
        $region51: #{head_v3_tiny_forward.1} parent=43 // pred_region
          %s1165 = smul.u32 8, %s27
        $region52: #{head_v3_tiny_forward.1} parent=43 // pred_fallthru
          _
      $region44: #{head_v3_tiny_forward.1} parent=5 // pred_fallthru
        _
      %p1166 = scmp.le.s32.totalorder 2, %s17
      // Predicated region
      $region53: #{head_v3_tiny_forward.1} parent=5 // pred_check
        %p1167 = pneg %p1166
      $region54: #{head_v3_tiny_forward.1} parent=5 // pred_check_branch
        %1169 = sbr.rel (%p1167) target = $region56
      $region55: #{head_v3_tiny_forward.1} parent=5 // pred_region
        %s1170 = ssub.s32 %s17, 2
        // Predicated region
        $region57: #{head_v3_tiny_forward.1} parent=55 // pred_check
          %p1171 = pneg %p200
        $region58: #{head_v3_tiny_forward.1} parent=55 // pred_check_branch
          %1173 = sbr.rel (%p1171) target = $region60
        $region59: #{head_v3_tiny_forward.1} parent=55 // pred_region
          %s1174 = sand.u32 %s185, 1
          %s1175 = scalar_lea.sflag [#allocation3], %s1174
          %s1176 = sand.u32 %s185, 1
          %s1177 = smul.addr %s1176, 128
          %s1178 = scalar_lea.vmem [#allocation2], %s1177
          %1179 = dma.done %s1175, 2048
        $region60: #{head_v3_tiny_forward.1} parent=55 // pred_fallthru
          _
        // Predicated region
        $region61: #{head_v3_tiny_forward.1} parent=55 // pred_check
          %p1180 = pneg %p228
        $region62: #{head_v3_tiny_forward.1} parent=55 // pred_check_branch
          %1182 = sbr.rel (%p1180) target = $region64
        $region63: #{head_v3_tiny_forward.1} parent=55 // pred_region
          %s1183 = smul.u32 8, %s29
          %p1184 = scmp.lt.s32.totalorder %s28, 1
          %s1185 = scalar_select %p1184, %s28, 1
          %p1186 = scmp.lt.s32.totalorder %s1183, 7
          %s1187 = scalar_select %p1186, %s1183, 7
          %s1188 = smul.addr %s1187, 12
          %s1189 = smul.addr %s1185, 96
          %s1190 = sadd.s32 %s1188, %s1189
          %s1191 = smul.addr %s1190, 8
          %s1192 = scalar_lea.vmem %s7, %s1191
        $region64: #{head_v3_tiny_forward.1} parent=55 // pred_fallthru
          _
      $region56: #{head_v3_tiny_forward.1} parent=5 // pred_fallthru
        _
    $region6: #{head_v3_tiny_forward.1} parent=1 // loop_footer
      %s21 = sadd.s32 1, %s17
    $region7: #{head_v3_tiny_forward.1} parent=1 // loop_footer_branch
      %16 = sbr.rel target = $region3
    $region8: #{head_v3_tiny_forward.1} parent=1 // loop_exit
      _
    %1193 = vsyncpa [#allocation3], 1
    %s1194 = scalar_lea.sflag [#allocation3], 1
    %1195 = vsyncpa %s1194, 1

</llo_original>
